<compile_context>
chip_gen: v7x
topology: tpu7x:2x2x1
jax: 0.10.0
libtpu: 0.0.40
codegen_flags: <defaults>
</compile_context>

<pallas_src>
import jax
import jax.numpy as jnp
import numpy as np
from jax.experimental import pallas as pl
from jax.experimental.pallas import tpu as pltpu


def generate_sinusoidal_embeddings(num_patches: int, embedding_dim: int) -> jnp.ndarray:
    """Vectorized replica of the PyTorch table.

    Intentionally matches the reference loop exactly: the exponent uses the
    even *column index* itself (denom = 10000^(2*i/d) with i = 0,2,4,...),
    not the canonical pair index i//2, and cos at column i+1 reuses the same
    denom. Computed in float32.
    """
    pos = np.arange(num_patches, dtype=np.float32)[:, None]               # (N, 1)
    i_even = np.arange(0, embedding_dim, 2, dtype=np.float32)[None, :]    # (1, ceil(D/2))
    denom = np.power(np.float32(10000.0),
                     np.float32(2.0) * i_even / np.float32(embedding_dim))
    angles = (pos / denom).astype(np.float32)                             # (N, ceil(D/2))

    emb = np.zeros((num_patches, embedding_dim), dtype=np.float32)
    emb[:, 0::2] = np.sin(angles)
    n_odd = emb[:, 1::2].shape[1]
    emb[:, 1::2] = np.cos(angles[:, :n_odd])
    return jnp.asarray(emb)


def _add_pos_emb_kernel(x_ref, pe_ref, o_ref):
    # x_ref: (TB, N, D) block; pe_ref: (N, D) (or (TN, D)) block.
    # Broadcast add over the leading batch dim — pure VPU, one vadd per vreg.
    o_ref[...] = x_ref[...] + pe_ref[...]


def _tpu_generation_params():
    """(target_block_bytes, vmem_budget_bytes, vmem_limit_cap_bytes)."""
    vmem_cap = 64 << 20  # conservative (v7x-class) default if the query fails
    try:
        vmem_cap = int(pltpu.get_tpu_info().vmem_capacity_bytes)
    except Exception:
        pass
    if vmem_cap <= (80 << 20):
        # v7x-class: 64 MiB VMEM, ~3.2 TB/s HBM -> bigger blocks to amortize
        # the ~0.35 us per-grid-step overhead against the faster DMA.
        target_block = 8 << 20
        limit_cap = min(vmem_cap - (8 << 20), 56 << 20)
    else:
        # v5e/v6e-class: 128 MiB VMEM -> generous budget, 4 MiB blocks are
        # already at the measured HBM-roofline plateau.
        target_block = 4 << 20
        limit_cap = vmem_cap - (16 << 20)
    budget = max(limit_cap - (8 << 20), 24 << 20)
    return target_block, budget, limit_cap


def _num_tensorcores() -> int:
    """Best-effort TensorCore count of device 0 (1 if unknown)."""
    try:
        return max(1, int(getattr(jax.devices()[0], "num_cores", 1)))
    except Exception:
        return 1


def patch_position_embedding(x: jnp.ndarray,
                             pos_emb: jnp.ndarray,
                             *,
                             batch_block: int | None = None,
                             donate_x: bool = False) -> jnp.ndarray:
    """out = x + pos_emb (broadcast over batch).

    x: (B, N, D); pos_emb: (N, D).
    batch_block: optional hint for batch rows per grid step (used if it fits VMEM).
    donate_x:    alias x's buffer to the output (only if x is dead afterwards).
    """
    B, N, D = x.shape
    assert pos_emb.shape == (N, D)
    if pos_emb.dtype != x.dtype:
        # Intentional deviation from PyTorch's type promotion: the add runs in
        # x's dtype (e.g. bf16 halves HBM traffic on a bandwidth-bound op).
        pos_emb = pos_emb.astype(x.dtype)

    target_block, vmem_budget, vmem_limit_cap = _tpu_generation_params()
    itemsize = int(np.dtype(x.dtype).itemsize)
    io_aliases = {0: 0} if donate_x else {}

    # Lane density: if D isn't a multiple of 128, flatten (N, D) -> (1, N*D)
    # (free, contiguous reshape) so the output last dim is maximally lane-dense.
    flatten = (D % 128 != 0)
    if flatten:
        x_w = x.reshape(B, 1, N * D)
        pe_w = pos_emb.reshape(1, N * D)
        Nw, Dw = 1, N * D
    else:
        x_w, pe_w, Nw, Dw = x, pos_emb, N, D

    row_bytes = Nw * Dw * itemsize          # one batch element of x
    pe_bytes = row_bytes                    # the table has the same footprint
    x_bytes = B * row_bytes

    # ---------------- Path A: single un-gridded call ----------------
    if batch_block is None and (2 * x_bytes + pe_bytes) <= (16 << 20):
        out = pl.pallas_call(
            _add_pos_emb_kernel,
            out_shape=jax.ShapeDtypeStruct((B, Nw, Dw), x.dtype),
            compiler_params=pltpu.CompilerParams(
                vmem_limit_bytes=int(min(32 << 20, vmem_limit_cap))),
            input_output_aliases=io_aliases,
        )(x_w, pe_w)
        return out.reshape(B, N, D) if flatten else out

    # ---------------- choose batch tile (Path B) ----------------
    # Working set: 2 in + 2 out buffers per x block + 2 buffers for the
    # (fetched-once) table block.
    tb = None
    if batch_block is not None:
        cand = max(1, int(batch_block))
        if 4 * cand * row_bytes + 2 * pe_bytes <= vmem_budget:
            tb = cand                       # respect the hint if it fits

    batch_only_fits = (4 * row_bytes + 2 * pe_bytes) <= vmem_budget
    if tb is None and batch_only_fits:
        max_by_vmem = max(1, (vmem_budget - 2 * pe_bytes) // (4 * row_bytes))
        tb = int(min(B, max(1, target_block // row_bytes), max_by_vmem))
        # Megacore: only on multi-TensorCore parts, give each core >= 2
        # pipelined steps as long as blocks stay >= 2 MiB. On single-TC
        # v5e/v6e this never fires (no benefit, only more grid steps).
        ncores = _num_tensorcores()
        if ncores > 1 and tb < B and (-(-B // tb)) < 2 * ncores:
            alt = max(1, -(-B // (2 * ncores)))
            if alt * row_bytes >= (2 << 20):
                tb = alt

    if tb is not None:
        grid_b = pl.cdiv(B, tb)             # padded final block; no divisor shrink
        needed = 4 * tb * row_bytes + 2 * pe_bytes
        vmem_limit = int(min(max(needed + (4 << 20), 32 << 20), vmem_limit_cap))
        out = pl.pallas_call(
            _add_pos_emb_kernel,
            out_shape=jax.ShapeDtypeStruct((B, Nw, Dw), x.dtype),
            grid=(grid_b,),
            in_specs=[
                # (TB, N, D): last two dims equal the full array dims -> legal
                # for any N, D; D (or N*D) stays on the lane axis.
                pl.BlockSpec((tb, Nw, Dw), lambda b: (b, 0, 0)),
                # Constant block index -> table DMA'd into VMEM once, reused.
                pl.BlockSpec((Nw, Dw), lambda b: (0, 0)),
            ],
            out_specs=pl.BlockSpec((tb, Nw, Dw), lambda b: (b, 0, 0)),
            compiler_params=pltpu.CompilerParams(
                dimension_semantics=("parallel",),
                vmem_limit_bytes=vmem_limit,
            ),
            input_output_aliases=io_aliases,
        )(x_w, pe_w)
        return out.reshape(B, N, D) if flatten else out

    # ---------------- Path C: rows / table too big -> tile N too ----------------
    # TODO(synk): Path C drops the lane-density flatten; it only triggers for
    # very large N*D rows, where D is normally already 128-aligned.
    d_bytes = D * itemsize
    tn = max(1, target_block // max(d_bytes, 1))
    if tn >= N:
        tn = N
    else:
        tn = max(8, (tn // 8) * 8)
        if tn >= N:
            tn = N
    # Working set: 2 in + 2 out x blocks (tb = 1) + 2 table blocks.
    while tn < N and tn > 8 and 6 * tn * d_bytes > vmem_budget:
        tn = max(8, ((tn // 2) // 8) * 8)
    needed = 6 * tn * d_bytes
    vmem_limit = int(min(max(needed + (4 << 20), 32 << 20), vmem_limit_cap))
    grid_n = pl.cdiv(N, tn)
    out = pl.pallas_call(
        _add_pos_emb_kernel,
        out_shape=jax.ShapeDtypeStruct((B, N, D), x.dtype),
        # N outer / batch inner: the table tile's block index is constant over
        # the inner batch sweep, so it is fetched once per N tile.
        grid=(grid_n, B),
        in_specs=[
            pl.BlockSpec((1, tn, D), lambda n, b: (b, n, 0)),
            pl.BlockSpec((tn, D), lambda n, b: (n, 0)),
        ],
        out_specs=pl.BlockSpec((1, tn, D), lambda n, b: (b, n, 0)),
        compiler_params=pltpu.CompilerParams(
            dimension_semantics=("arbitrary", "parallel"),
            vmem_limit_bytes=vmem_limit,
        ),
        input_output_aliases=io_aliases,
    )(x, pos_emb)
    return out


if __name__ == "__main__":
    # Module defaults: num_patches=196, embedding_dim=512.
    num_patches, embedding_dim = 196, 512
    pos_emb = generate_sinusoidal_embeddings(num_patches, embedding_dim)

    key = jax.random.PRNGKey(0)
    k1, k2, k3 = jax.random.split(key, 3)

    # 1) Module-shaped small input (batch=2): exercises the un-gridded fast path.
    x1 = jax.random.normal(k1, (2, num_patches, embedding_dim), dtype=jnp.float32)
    o1 = jax.block_until_ready(patch_position_embedding(x1, pos_emb))
    np.testing.assert_allclose(np.asarray(o1), np.asarray(x1 + pos_emb[None, :, :]),
                               rtol=1e-6, atol=1e-6)

    # 2) Non-divisible batch with a forced tile: exercises the cdiv grid with a
    #    padded final block and the resident-table gridded path.
    x2 = jax.random.normal(k2, (13, num_patches, embedding_dim), dtype=jnp.float32)
    o2 = jax.block_until_ready(patch_position_embedding(x2, pos_emb, batch_block=4))
    np.testing.assert_allclose(np.asarray(o2), np.asarray(x2 + pos_emb[None, :, :]),
                               rtol=1e-6, atol=1e-6)

    # 3) Odd embedding_dim (not a multiple of 128): exercises the lane-dense
    #    flatten path and the sin/cos interleave guard in the table.
    pe3 = generate_sinusoidal_embeddings(16, 33)
    x3 = jax.random.normal(k3, (5, 16, 33), dtype=jnp.float32)
    o3 = jax.block_until_ready(patch_position_embedding(x3, pe3))
    np.testing.assert_allclose(np.asarray(o3), np.asarray(x3 + pe3[None, :, :]),
                               rtol=1e-6, atol=1e-6)

    print("KERNEL_OK")
</pallas_src>

<mosaic_0001>
module attributes {stable_mosaic.version = 11 : i64} {
  func.func @_add_pos_emb_kernel(%arg0: memref<2x196x512xf32, #tpu.memory_space<vmem>>, %arg1: memref<196x512xf32, #tpu.memory_space<vmem>>, %arg2: memref<2x196x512xf32, #tpu.memory_space<vmem>>) attributes {dimension_semantics = [], scalar_prefetch = 0 : i64, scratch_operands = 0 : i64, tpu.core_type = #tpu.core_type<tc>} {
    %c0 = arith.constant 0 : index
    %c0_0 = arith.constant 0 : index
    %c0_1 = arith.constant 0 : index
    %0 = vector.load %arg0[%c0, %c0_0, %c0_1] : memref<2x196x512xf32, #tpu.memory_space<vmem>>, vector<2x196x512xf32>
    %c0_2 = arith.constant 0 : index
    %c0_3 = arith.constant 0 : index
    %1 = vector.load %arg1[%c0_2, %c0_3] : memref<196x512xf32, #tpu.memory_space<vmem>>, vector<196x512xf32>
    %2 = vector.shape_cast %1 : vector<196x512xf32> to vector<1x196x512xf32>
    %3 = vector.broadcast %2 : vector<1x196x512xf32> to vector<2x196x512xf32>
    %4 = arith.addf %0, %3 : vector<2x196x512xf32>
    %c0_4 = arith.constant 0 : index
    %c0_5 = arith.constant 0 : index
    %c0_6 = arith.constant 0 : index
    %5 = vector.load %arg2[%c0_4, %c0_5, %c0_6] : memref<2x196x512xf32, #tpu.memory_space<vmem>>, vector<2x196x512xf32>
    tpu.vector_store %arg2[%c0_4, %c0_5, %c0_6], %4 {strides = array<i32>} : memref<2x196x512xf32, #tpu.memory_space<vmem>>, vector<2x196x512xf32>,
    return
  }
}

</mosaic_0001>

<llo_original>
// kernel: tpu_custom_call.1
$region0: #{tpu_custom_call.1}
  #allocation0 [shape = 'u32[]', space=smem, size = 0x4, offset = 0x4, fixed_abs, tag = 'smem constant byte address 0x4 - core index']
  #allocation1 [shape = 'u32[144,128]{1,0:T(1,128)}', space=vmem, size = 0x12000, scoped, tag = 'internal scratch']
  %s0 = inlined_call_operand.vmem [shape: f32[2,196,512], index: 0, kind: input, shape index: {}]
  %s1 = inlined_call_operand.vmem [shape: f32[196,512], index: 1, kind: input, shape index: {}]
  %s2 = inlined_call_operand.vmem [shape: f32[2,196,512], index: 2, kind: output, shape index: {}]
  %s3 = sld [smem:[#allocation0]]
  $region18: #{tpu_custom_call.1} parent=0
    _
  %s5 = ssub.s32 1, %s3
  %s6 = scalar_select 0, %s5, %s3
  // Predicated region
  $region2: #{tpu_custom_call.1} parent=0 // pred_check
    _
  $region3: #{tpu_custom_call.1} parent=0 // pred_check_branch
    %8 = sbr.rel (0) target = $region5
  $region4: #{tpu_custom_call.1} parent=0 // pred_region
    _
  $region5: #{tpu_custom_call.1} parent=0 // pred_fallthru
    _
  // Predicated region
  $region6: #{tpu_custom_call.1} parent=0 // pred_check
    _
  $region7: #{tpu_custom_call.1} parent=0 // pred_check_branch
    %10 = sbr.rel (0) target = $region9
  $region8: #{tpu_custom_call.1} parent=0 // pred_region
    _
  $region9: #{tpu_custom_call.1} parent=0 // pred_fallthru
    _
  %v11 = vld [vmem:[%s0] sm:$0xff]
  %v12 = vld [vmem:[%s0 + $0x8] sm:$0xff]
  %v13 = vld [vmem:[%s0 + $0x10] sm:$0xff]
  %v14 = vld [vmem:[%s0 + $0x18] sm:$0xff]
  %v15 = vld [vmem:[%s0 + $0x20] sm:$0xff]
  %v16 = vld [vmem:[%s0 + $0x28] sm:$0xff]
  %v17 = vld [vmem:[%s0 + $0x30] sm:$0xff]
  %v18 = vld [vmem:[%s0 + $0x38] sm:$0xff]
  %v19 = vld [vmem:[%s0 + $0x40] sm:$0xff]
  %v20 = vld [vmem:[%s0 + $0x48] sm:$0xff]
  %v21 = vld [vmem:[%s0 + $0x50] sm:$0xff]
  %v22 = vld [vmem:[%s0 + $0x58] sm:$0xff]
  %v23 = vld [vmem:[%s0 + $0x60] sm:$0xff]
  %v24 = vld [vmem:[%s0 + $0x68] sm:$0xff]
  %v25 = vld [vmem:[%s0 + $0x70] sm:$0xff]
  %v26 = vld [vmem:[%s0 + $0x78] sm:$0xff]
  %v27 = vld [vmem:[%s0 + $0x80] sm:$0xff]
  %v28 = vld [vmem:[%s0 + $0x88] sm:$0xff]
  %v29 = vld [vmem:[%s0 + $0x90] sm:$0xff]
  %v30 = vld [vmem:[%s0 + $0x98] sm:$0xff]
  %v31 = vld [vmem:[%s0 + $0xa0] sm:$0xff]
  %v32 = vld [vmem:[%s0 + $0xa8] sm:$0xff]
  %v33 = vld [vmem:[%s0 + $0xb0] sm:$0xff]
  %v34 = vld [vmem:[%s0 + $0xb8] sm:$0xff]
  %v35 = vld [vmem:[%s0 + $0xc0] sm:$0xff]
  %v36 = vld [vmem:[%s0 + $0xc8] sm:$0xff]
  %v37 = vld [vmem:[%s0 + $0xd0] sm:$0xff]
  %v38 = vld [vmem:[%s0 + $0xd8] sm:$0xff]
  %v39 = vld [vmem:[%s0 + $0xe0] sm:$0xff]
  %v40 = vld [vmem:[%s0 + $0xe8] sm:$0xff]
  %v41 = vld [vmem:[%s0 + $0xf0] sm:$0xff]
  %v42 = vld [vmem:[%s0 + $0xf8] sm:$0xff]
  %v43 = vld [vmem:[%s0 + $0x100] sm:$0xff]
  %v44 = vld [vmem:[%s0 + $0x108] sm:$0xff]
  %v45 = vld [vmem:[%s0 + $0x110] sm:$0xff]
  %v46 = vld [vmem:[%s0 + $0x118] sm:$0xff]
  %v47 = vld [vmem:[%s0 + $0x120] sm:$0xff]
  %v48 = vld [vmem:[%s0 + $0x128] sm:$0xff]
  %v49 = vld [vmem:[%s0 + $0x130] sm:$0xff]
  %v50 = vld [vmem:[%s0 + $0x138] sm:$0xff]
  %v51 = vld [vmem:[%s0 + $0x140] sm:$0xff]
  %v52 = vld [vmem:[%s0 + $0x148] sm:$0xff]
  %v53 = vld [vmem:[%s0 + $0x150] sm:$0xff]
  %v54 = vld [vmem:[%s0 + $0x158] sm:$0xff]
  %v55 = vld [vmem:[%s0 + $0x160] sm:$0xff]
  %v56 = vld [vmem:[%s0 + $0x168] sm:$0xff]
  %v57 = vld [vmem:[%s0 + $0x170] sm:$0xff]
  %v58 = vld [vmem:[%s0 + $0x178] sm:$0xff]
  %v59 = vld [vmem:[%s0 + $0x180] sm:$0xff]
  %v60 = vld [vmem:[%s0 + $0x188] sm:$0xff]
  %v61 = vld [vmem:[%s0 + $0x190] sm:$0xff]
  %v62 = vld [vmem:[%s0 + $0x198] sm:$0xff]
  %v63 = vld [vmem:[%s0 + $0x1a0] sm:$0xff]
  %v64 = vld [vmem:[%s0 + $0x1a8] sm:$0xff]
  %v65 = vld [vmem:[%s0 + $0x1b0] sm:$0xff]
  %v66 = vld [vmem:[%s0 + $0x1b8] sm:$0xff]
  %v67 = vld [vmem:[%s0 + $0x1c0] sm:$0xff]
  %v68 = vld [vmem:[%s0 + $0x1c8] sm:$0xff]
  %v69 = vld [vmem:[%s0 + $0x1d0] sm:$0xff]
  %v70 = vld [vmem:[%s0 + $0x1d8] sm:$0xff]
  %v71 = vld [vmem:[%s0 + $0x1e0] sm:$0xff]
  %v72 = vld [vmem:[%s0 + $0x1e8] sm:$0xff]
  %v73 = vld [vmem:[%s0 + $0x1f0] sm:$0xff]
  %v74 = vld [vmem:[%s0 + $0x1f8] sm:$0xff]
  %v75 = vld [vmem:[%s0 + $0x200] sm:$0xff]
  %v76 = vld [vmem:[%s0 + $0x208] sm:$0xff]
  %v77 = vld [vmem:[%s0 + $0x210] sm:$0xff]
  %v78 = vld [vmem:[%s0 + $0x218] sm:$0xff]
  %v79 = vld [vmem:[%s0 + $0x220] sm:$0xff]
  %v80 = vld [vmem:[%s0 + $0x228] sm:$0xff]
  %v81 = vld [vmem:[%s0 + $0x230] sm:$0xff]
  %v82 = vld [vmem:[%s0 + $0x238] sm:$0xff]
  %v83 = vld [vmem:[%s0 + $0x240] sm:$0xff]
  %v84 = vld [vmem:[%s0 + $0x248] sm:$0xff]
  %v85 = vld [vmem:[%s0 + $0x250] sm:$0xff]
  %v86 = vld [vmem:[%s0 + $0x258] sm:$0xff]
  %v87 = vld [vmem:[%s0 + $0x260] sm:$0xff]
  %v88 = vld [vmem:[%s0 + $0x268] sm:$0xff]
  %v89 = vld [vmem:[%s0 + $0x270] sm:$0xff]
  %v90 = vld [vmem:[%s0 + $0x278] sm:$0xff]
  %v91 = vld [vmem:[%s0 + $0x280] sm:$0xff]
  %v92 = vld [vmem:[%s0 + $0x288] sm:$0xff]
  %v93 = vld [vmem:[%s0 + $0x290] sm:$0xff]
  %v94 = vld [vmem:[%s0 + $0x298] sm:$0xff]
  %v95 = vld [vmem:[%s0 + $0x2a0] sm:$0xff]
  %v96 = vld [vmem:[%s0 + $0x2a8] sm:$0xff]
  %v97 = vld [vmem:[%s0 + $0x2b0] sm:$0xff]
  %v98 = vld [vmem:[%s0 + $0x2b8] sm:$0xff]
  %v99 = vld [vmem:[%s0 + $0x2c0] sm:$0xff]
  %v100 = vld [vmem:[%s0 + $0x2c8] sm:$0xff]
  %v101 = vld [vmem:[%s0 + $0x2d0] sm:$0xff]
  %v102 = vld [vmem:[%s0 + $0x2d8] sm:$0xff]
  %v103 = vld [vmem:[%s0 + $0x2e0] sm:$0xff]
  %v104 = vld [vmem:[%s0 + $0x2e8] sm:$0xff]
  %v105 = vld [vmem:[%s0 + $0x2f0] sm:$0xff]
  %v106 = vld [vmem:[%s0 + $0x2f8] sm:$0xff]
  %v107 = vld [vmem:[%s0 + $0x300] sm:$0xf]
  %v108 = vld [vmem:[%s0 + $0x308] sm:$0xf]
  %v109 = vld [vmem:[%s0 + $0x310] sm:$0xf]
  %v110 = vld [vmem:[%s0 + $0x318] sm:$0xf]
  %v111 = vld [vmem:[%s0 + $0x320] sm:$0xff]
  %v112 = vld [vmem:[%s0 + $0x328] sm:$0xff]
  %v113 = vld [vmem:[%s0 + $0x330] sm:$0xff]
  %v114 = vld [vmem:[%s0 + $0x338] sm:$0xff]
  %v115 = vld [vmem:[%s0 + $0x340] sm:$0xff]
  %v116 = vld [vmem:[%s0 + $0x348] sm:$0xff]
  %v117 = vld [vmem:[%s0 + $0x350] sm:$0xff]
  %v118 = vld [vmem:[%s0 + $0x358] sm:$0xff]
  %v119 = vld [vmem:[%s0 + $0x360] sm:$0xff]
  %v120 = vld [vmem:[%s0 + $0x368] sm:$0xff]
  %v121 = vld [vmem:[%s0 + $0x370] sm:$0xff]
  %v122 = vld [vmem:[%s0 + $0x378] sm:$0xff]
  %v123 = vld [vmem:[%s0 + $0x380] sm:$0xff]
  %v124 = vld [vmem:[%s0 + $0x388] sm:$0xff]
  %v125 = vld [vmem:[%s0 + $0x390] sm:$0xff]
  %v126 = vld [vmem:[%s0 + $0x398] sm:$0xff]
  %v127 = vld [vmem:[%s0 + $0x3a0] sm:$0xff]
  %v128 = vld [vmem:[%s0 + $0x3a8] sm:$0xff]
  %v129 = vld [vmem:[%s0 + $0x3b0] sm:$0xff]
  %v130 = vld [vmem:[%s0 + $0x3b8] sm:$0xff]
  %v131 = vld [vmem:[%s0 + $0x3c0] sm:$0xff]
  %v132 = vld [vmem:[%s0 + $0x3c8] sm:$0xff]
  %v133 = vld [vmem:[%s0 + $0x3d0] sm:$0xff]
  %v134 = vld [vmem:[%s0 + $0x3d8] sm:$0xff]
  %v135 = vld [vmem:[%s0 + $0x3e0] sm:$0xff]
  %v136 = vld [vmem:[%s0 + $0x3e8] sm:$0xff]
  %v137 = vld [vmem:[%s0 + $0x3f0] sm:$0xff]
  %v138 = vld [vmem:[%s0 + $0x3f8] sm:$0xff]
  %v139 = vld [vmem:[%s0 + $0x400] sm:$0xff]
  %v140 = vld [vmem:[%s0 + $0x408] sm:$0xff]
  %v141 = vld [vmem:[%s0 + $0x410] sm:$0xff]
  %v142 = vld [vmem:[%s0 + $0x418] sm:$0xff]
  %v143 = vld [vmem:[%s0 + $0x420] sm:$0xff]
  %v144 = vld [vmem:[%s0 + $0x428] sm:$0xff]
  %v145 = vld [vmem:[%s0 + $0x430] sm:$0xff]
  %v146 = vld [vmem:[%s0 + $0x438] sm:$0xff]
  %v147 = vld [vmem:[%s0 + $0x440] sm:$0xff]
  %v148 = vld [vmem:[%s0 + $0x448] sm:$0xff]
  %v149 = vld [vmem:[%s0 + $0x450] sm:$0xff]
  %v150 = vld [vmem:[%s0 + $0x458] sm:$0xff]
  %v151 = vld [vmem:[%s0 + $0x460] sm:$0xff]
  %v152 = vld [vmem:[%s0 + $0x468] sm:$0xff]
  %v153 = vld [vmem:[%s0 + $0x470] sm:$0xff]
  %v154 = vld [vmem:[%s0 + $0x478] sm:$0xff]
  %v155 = vld [vmem:[%s0 + $0x480] sm:$0xff]
  %v156 = vld [vmem:[%s0 + $0x488] sm:$0xff]
  %v157 = vld [vmem:[%s0 + $0x490] sm:$0xff]
  %v158 = vld [vmem:[%s0 + $0x498] sm:$0xff]
  %v159 = vld [vmem:[%s0 + $0x4a0] sm:$0xff]
  %v160 = vld [vmem:[%s0 + $0x4a8] sm:$0xff]
  %v161 = vld [vmem:[%s0 + $0x4b0] sm:$0xff]
  %v162 = vld [vmem:[%s0 + $0x4b8] sm:$0xff]
  %v163 = vld [vmem:[%s0 + $0x4c0] sm:$0xff]
  %v164 = vld [vmem:[%s0 + $0x4c8] sm:$0xff]
  %v165 = vld [vmem:[%s0 + $0x4d0] sm:$0xff]
  %v166 = vld [vmem:[%s0 + $0x4d8] sm:$0xff]
  %v167 = vld [vmem:[%s0 + $0x4e0] sm:$0xff]
  %v168 = vld [vmem:[%s0 + $0x4e8] sm:$0xff]
  %v169 = vld [vmem:[%s0 + $0x4f0] sm:$0xff]
  %v170 = vld [vmem:[%s0 + $0x4f8] sm:$0xff]
  %v171 = vld [vmem:[%s0 + $0x500] sm:$0xff]
  %v172 = vld [vmem:[%s0 + $0x508] sm:$0xff]
  %v173 = vld [vmem:[%s0 + $0x510] sm:$0xff]
  %v174 = vld [vmem:[%s0 + $0x518] sm:$0xff]
  %v175 = vld [vmem:[%s0 + $0x520] sm:$0xff]
  %v176 = vld [vmem:[%s0 + $0x528] sm:$0xff]
  %v177 = vld [vmem:[%s0 + $0x530] sm:$0xff]
  %v178 = vld [vmem:[%s0 + $0x538] sm:$0xff]
  %v179 = vld [vmem:[%s0 + $0x540] sm:$0xff]
  %v180 = vld [vmem:[%s0 + $0x548] sm:$0xff]
  %v181 = vld [vmem:[%s0 + $0x550] sm:$0xff]
  %v182 = vld [vmem:[%s0 + $0x558] sm:$0xff]
  %v183 = vld [vmem:[%s0 + $0x560] sm:$0xff]
  %v184 = vld [vmem:[%s0 + $0x568] sm:$0xff]
  %v185 = vld [vmem:[%s0 + $0x570] sm:$0xff]
  %v186 = vld [vmem:[%s0 + $0x578] sm:$0xff]
  %v187 = vld [vmem:[%s0 + $0x580] sm:$0xff]
  %v188 = vld [vmem:[%s0 + $0x588] sm:$0xff]
  %v189 = vld [vmem:[%s0 + $0x590] sm:$0xff]
  %v190 = vld [vmem:[%s0 + $0x598] sm:$0xff]
  %v191 = vld [vmem:[%s0 + $0x5a0] sm:$0xff]
  %v192 = vld [vmem:[%s0 + $0x5a8] sm:$0xff]
  %v193 = vld [vmem:[%s0 + $0x5b0] sm:$0xff]
  %v194 = vld [vmem:[%s0 + $0x5b8] sm:$0xff]
  %v195 = vld [vmem:[%s0 + $0x5c0] sm:$0xff]
  %v196 = vld [vmem:[%s0 + $0x5c8] sm:$0xff]
  %v197 = vld [vmem:[%s0 + $0x5d0] sm:$0xff]
  %v198 = vld [vmem:[%s0 + $0x5d8] sm:$0xff]
  %v199 = vld [vmem:[%s0 + $0x5e0] sm:$0xff]
  %v200 = vld [vmem:[%s0 + $0x5e8] sm:$0xff]
  %v201 = vld [vmem:[%s0 + $0x5f0] sm:$0xff]
  %v202 = vld [vmem:[%s0 + $0x5f8] sm:$0xff]
  %v203 = vld [vmem:[%s0 + $0x600] sm:$0xff]
  %v204 = vld [vmem:[%s0 + $0x608] sm:$0xff]
  %v205 = vld [vmem:[%s0 + $0x610] sm:$0xff]
  %v206 = vld [vmem:[%s0 + $0x618] sm:$0xff]
  %v207 = vld [vmem:[%s0 + $0x620] sm:$0xf]
  %v208 = vld [vmem:[%s0 + $0x628] sm:$0xf]
  %v209 = vld [vmem:[%s0 + $0x630] sm:$0xf]
  %v210 = vld [vmem:[%s0 + $0x638] sm:$0xf]
  %v211 = vld [vmem:[%s1] sm:$0xff]
  %v212 = vld [vmem:[%s1 + $0x8] sm:$0xff]
  %v213 = vld [vmem:[%s1 + $0x10] sm:$0xff]
  %v214 = vld [vmem:[%s1 + $0x18] sm:$0xff]
  %v215 = vld [vmem:[%s1 + $0x20] sm:$0xff]
  %v216 = vld [vmem:[%s1 + $0x28] sm:$0xff]
  %v217 = vld [vmem:[%s1 + $0x30] sm:$0xff]
  %v218 = vld [vmem:[%s1 + $0x38] sm:$0xff]
  %v219 = vld [vmem:[%s1 + $0x40] sm:$0xff]
  %v220 = vld [vmem:[%s1 + $0x48] sm:$0xff]
  %v221 = vld [vmem:[%s1 + $0x50] sm:$0xff]
  %v222 = vld [vmem:[%s1 + $0x58] sm:$0xff]
  %v223 = vld [vmem:[%s1 + $0x60] sm:$0xff]
  %v224 = vld [vmem:[%s1 + $0x68] sm:$0xff]
  %v225 = vld [vmem:[%s1 + $0x70] sm:$0xff]
  %v226 = vld [vmem:[%s1 + $0x78] sm:$0xff]
  %v227 = vld [vmem:[%s1 + $0x80] sm:$0xff]
  %v228 = vld [vmem:[%s1 + $0x88] sm:$0xff]
  %v229 = vld [vmem:[%s1 + $0x90] sm:$0xff]
  %v230 = vld [vmem:[%s1 + $0x98] sm:$0xff]
  %v231 = vld [vmem:[%s1 + $0xa0] sm:$0xff]
  %v232 = vld [vmem:[%s1 + $0xa8] sm:$0xff]
  %v233 = vld [vmem:[%s1 + $0xb0] sm:$0xff]
  %v234 = vld [vmem:[%s1 + $0xb8] sm:$0xff]
  %v235 = vld [vmem:[%s1 + $0xc0] sm:$0xff]
  %v236 = vld [vmem:[%s1 + $0xc8] sm:$0xff]
  %v237 = vld [vmem:[%s1 + $0xd0] sm:$0xff]
  %v238 = vld [vmem:[%s1 + $0xd8] sm:$0xff]
  %v239 = vld [vmem:[%s1 + $0xe0] sm:$0xff]
  %v240 = vld [vmem:[%s1 + $0xe8] sm:$0xff]
  %v241 = vld [vmem:[%s1 + $0xf0] sm:$0xff]
  %v242 = vld [vmem:[%s1 + $0xf8] sm:$0xff]
  %v243 = vld [vmem:[%s1 + $0x100] sm:$0xff]
  %v244 = vld [vmem:[%s1 + $0x108] sm:$0xff]
  %v245 = vld [vmem:[%s1 + $0x110] sm:$0xff]
  %v246 = vld [vmem:[%s1 + $0x118] sm:$0xff]
  %v247 = vld [vmem:[%s1 + $0x120] sm:$0xff]
  %v248 = vld [vmem:[%s1 + $0x128] sm:$0xff]
  %v249 = vld [vmem:[%s1 + $0x130] sm:$0xff]
  %v250 = vld [vmem:[%s1 + $0x138] sm:$0xff]
  %v251 = vld [vmem:[%s1 + $0x140] sm:$0xff]
  %v252 = vld [vmem:[%s1 + $0x148] sm:$0xff]
  %v253 = vld [vmem:[%s1 + $0x150] sm:$0xff]
  %v254 = vld [vmem:[%s1 + $0x158] sm:$0xff]
  %v255 = vld [vmem:[%s1 + $0x160] sm:$0xff]
  %v256 = vld [vmem:[%s1 + $0x168] sm:$0xff]
  %v257 = vld [vmem:[%s1 + $0x170] sm:$0xff]
  %v258 = vld [vmem:[%s1 + $0x178] sm:$0xff]
  %v259 = vld [vmem:[%s1 + $0x180] sm:$0xff]
  %v260 = vld [vmem:[%s1 + $0x188] sm:$0xff]
  %v261 = vld [vmem:[%s1 + $0x190] sm:$0xff]
  %v262 = vld [vmem:[%s1 + $0x198] sm:$0xff]
  %v263 = vld [vmem:[%s1 + $0x1a0] sm:$0xff]
  %v264 = vld [vmem:[%s1 + $0x1a8] sm:$0xff]
  %v265 = vld [vmem:[%s1 + $0x1b0] sm:$0xff]
  %v266 = vld [vmem:[%s1 + $0x1b8] sm:$0xff]
  %v267 = vld [vmem:[%s1 + $0x1c0] sm:$0xff]
  %v268 = vld [vmem:[%s1 + $0x1c8] sm:$0xff]
  %v269 = vld [vmem:[%s1 + $0x1d0] sm:$0xff]
  %v270 = vld [vmem:[%s1 + $0x1d8] sm:$0xff]
  %v271 = vld [vmem:[%s1 + $0x1e0] sm:$0xff]
  %v272 = vld [vmem:[%s1 + $0x1e8] sm:$0xff]
  %v273 = vld [vmem:[%s1 + $0x1f0] sm:$0xff]
  %v274 = vld [vmem:[%s1 + $0x1f8] sm:$0xff]
  %v275 = vld [vmem:[%s1 + $0x200] sm:$0xff]
  %v276 = vld [vmem:[%s1 + $0x208] sm:$0xff]
  %v277 = vld [vmem:[%s1 + $0x210] sm:$0xff]
  %v278 = vld [vmem:[%s1 + $0x218] sm:$0xff]
  %v279 = vld [vmem:[%s1 + $0x220] sm:$0xff]
  %v280 = vld [vmem:[%s1 + $0x228] sm:$0xff]
  %v281 = vld [vmem:[%s1 + $0x230] sm:$0xff]
  %v282 = vld [vmem:[%s1 + $0x238] sm:$0xff]
  %v283 = vld [vmem:[%s1 + $0x240] sm:$0xff]
  %v284 = vld [vmem:[%s1 + $0x248] sm:$0xff]
  %v285 = vld [vmem:[%s1 + $0x250] sm:$0xff]
  %v286 = vld [vmem:[%s1 + $0x258] sm:$0xff]
  %v287 = vld [vmem:[%s1 + $0x260] sm:$0xff]
  %v288 = vld [vmem:[%s1 + $0x268] sm:$0xff]
  %v289 = vld [vmem:[%s1 + $0x270] sm:$0xff]
  %v290 = vld [vmem:[%s1 + $0x278] sm:$0xff]
  %v291 = vld [vmem:[%s1 + $0x280] sm:$0xff]
  %v292 = vld [vmem:[%s1 + $0x288] sm:$0xff]
  %v293 = vld [vmem:[%s1 + $0x290] sm:$0xff]
  %v294 = vld [vmem:[%s1 + $0x298] sm:$0xff]
  %v295 = vld [vmem:[%s1 + $0x2a0] sm:$0xff]
  %v296 = vld [vmem:[%s1 + $0x2a8] sm:$0xff]
  %v297 = vld [vmem:[%s1 + $0x2b0] sm:$0xff]
  %v298 = vld [vmem:[%s1 + $0x2b8] sm:$0xff]
  %v299 = vld [vmem:[%s1 + $0x2c0] sm:$0xff]
  %v300 = vld [vmem:[%s1 + $0x2c8] sm:$0xff]
  %v301 = vld [vmem:[%s1 + $0x2d0] sm:$0xff]
  %v302 = vld [vmem:[%s1 + $0x2d8] sm:$0xff]
  %v303 = vld [vmem:[%s1 + $0x2e0] sm:$0xff]
  %v304 = vld [vmem:[%s1 + $0x2e8] sm:$0xff]
  %v305 = vld [vmem:[%s1 + $0x2f0] sm:$0xff]
  %v306 = vld [vmem:[%s1 + $0x2f8] sm:$0xff]
  %v307 = vld [vmem:[%s1 + $0x300] sm:$0xf]
  %v308 = vld [vmem:[%s1 + $0x308] sm:$0xf]
  %v309 = vld [vmem:[%s1 + $0x310] sm:$0xf]
  %v310 = vld [vmem:[%s1 + $0x318] sm:$0xf]
  %v311 = vadd.f32 %v11, %v211
  %v312 = vadd.f32 %v12, %v212
  %v313 = vadd.f32 %v13, %v213
  %v314 = vadd.f32 %v14, %v214
  %v315 = vadd.f32 %v15, %v215
  %v316 = vadd.f32 %v16, %v216
  %v317 = vadd.f32 %v17, %v217
  %v318 = vadd.f32 %v18, %v218
  %v319 = vadd.f32 %v19, %v219
  %v320 = vadd.f32 %v20, %v220
  %v321 = vadd.f32 %v21, %v221
  %v322 = vadd.f32 %v22, %v222
  %v323 = vadd.f32 %v23, %v223
  %v324 = vadd.f32 %v24, %v224
  %v325 = vadd.f32 %v25, %v225
  %v326 = vadd.f32 %v26, %v226
  %v327 = vadd.f32 %v27, %v227
  %v328 = vadd.f32 %v28, %v228
  %v329 = vadd.f32 %v29, %v229
  %v330 = vadd.f32 %v30, %v230
  %v331 = vadd.f32 %v31, %v231
  %v332 = vadd.f32 %v32, %v232
  %v333 = vadd.f32 %v33, %v233
  %v334 = vadd.f32 %v34, %v234
  %v335 = vadd.f32 %v35, %v235
  %v336 = vadd.f32 %v36, %v236
  %v337 = vadd.f32 %v37, %v237
  %v338 = vadd.f32 %v38, %v238
  %v339 = vadd.f32 %v39, %v239
  %v340 = vadd.f32 %v40, %v240
  %v341 = vadd.f32 %v41, %v241
  %v342 = vadd.f32 %v42, %v242
  %v343 = vadd.f32 %v43, %v243
  %v344 = vadd.f32 %v44, %v244
  %v345 = vadd.f32 %v45, %v245
  %v346 = vadd.f32 %v46, %v246
  %v347 = vadd.f32 %v47, %v247
  %v348 = vadd.f32 %v48, %v248
  %v349 = vadd.f32 %v49, %v249
  %v350 = vadd.f32 %v50, %v250
  %v351 = vadd.f32 %v51, %v251
  %v352 = vadd.f32 %v52, %v252
  %v353 = vadd.f32 %v53, %v253
  %v354 = vadd.f32 %v54, %v254
  %v355 = vadd.f32 %v55, %v255
  %v356 = vadd.f32 %v56, %v256
  %v357 = vadd.f32 %v57, %v257
  %v358 = vadd.f32 %v58, %v258
  %v359 = vadd.f32 %v59, %v259
  %v360 = vadd.f32 %v60, %v260
  %v361 = vadd.f32 %v61, %v261
  %v362 = vadd.f32 %v62, %v262
  %v363 = vadd.f32 %v63, %v263
  %v364 = vadd.f32 %v64, %v264
  %v365 = vadd.f32 %v65, %v265
  %v366 = vadd.f32 %v66, %v266
  %v367 = vadd.f32 %v67, %v267
  %v368 = vadd.f32 %v68, %v268
  %v369 = vadd.f32 %v69, %v269
  %v370 = vadd.f32 %v70, %v270
  %v371 = vadd.f32 %v71, %v271
  %v372 = vadd.f32 %v72, %v272
  %v373 = vadd.f32 %v73, %v273
  %v374 = vadd.f32 %v74, %v274
  %v375 = vadd.f32 %v75, %v275
  %v376 = vadd.f32 %v76, %v276
  %v377 = vadd.f32 %v77, %v277
  %v378 = vadd.f32 %v78, %v278
  %v379 = vadd.f32 %v79, %v279
  %v380 = vadd.f32 %v80, %v280
  %v381 = vadd.f32 %v81, %v281
  %v382 = vadd.f32 %v82, %v282
  %v383 = vadd.f32 %v83, %v283
  %v384 = vadd.f32 %v84, %v284
  %v385 = vadd.f32 %v85, %v285
  %v386 = vadd.f32 %v86, %v286
  %v387 = vadd.f32 %v87, %v287
  %v388 = vadd.f32 %v88, %v288
  %v389 = vadd.f32 %v89, %v289
  %v390 = vadd.f32 %v90, %v290
  %v391 = vadd.f32 %v91, %v291
  %v392 = vadd.f32 %v92, %v292
  %v393 = vadd.f32 %v93, %v293
  %v394 = vadd.f32 %v94, %v294
  %v395 = vadd.f32 %v95, %v295
  %v396 = vadd.f32 %v96, %v296
  %v397 = vadd.f32 %v97, %v297
  %v398 = vadd.f32 %v98, %v298
  %v399 = vadd.f32 %v99, %v299
  %v400 = vadd.f32 %v100, %v300
  %v401 = vadd.f32 %v101, %v301
  %v402 = vadd.f32 %v102, %v302
  %v403 = vadd.f32 %v103, %v303
  %v404 = vadd.f32 %v104, %v304
  %v405 = vadd.f32 %v105, %v305
  %v406 = vadd.f32 %v106, %v306
  %v407 = vadd.f32 %v107, %v307
  %v408 = vadd.f32 %v108, %v308
  %v409 = vadd.f32 %v109, %v309
  %v410 = vadd.f32 %v110, %v310
  %v411 = vadd.f32 %v111, %v211
  %v412 = vadd.f32 %v112, %v212
  %v413 = vadd.f32 %v113, %v213
  %v414 = vadd.f32 %v114, %v214
  %v415 = vadd.f32 %v115, %v215
  %v416 = vadd.f32 %v116, %v216
  %v417 = vadd.f32 %v117, %v217
  %v418 = vadd.f32 %v118, %v218
  %v419 = vadd.f32 %v119, %v219
  %v420 = vadd.f32 %v120, %v220
  %v421 = vadd.f32 %v121, %v221
  %v422 = vadd.f32 %v122, %v222
  %v423 = vadd.f32 %v123, %v223
  %v424 = vadd.f32 %v124, %v224
  %v425 = vadd.f32 %v125, %v225
  %v426 = vadd.f32 %v126, %v226
  %v427 = vadd.f32 %v127, %v227
  %v428 = vadd.f32 %v128, %v228
  %v429 = vadd.f32 %v129, %v229
  %v430 = vadd.f32 %v130, %v230
  %v431 = vadd.f32 %v131, %v231
  %v432 = vadd.f32 %v132, %v232
  %v433 = vadd.f32 %v133, %v233
  %v434 = vadd.f32 %v134, %v234
  %v435 = vadd.f32 %v135, %v235
  %v436 = vadd.f32 %v136, %v236
  %v437 = vadd.f32 %v137, %v237
  %v438 = vadd.f32 %v138, %v238
  %v439 = vadd.f32 %v139, %v239
  %v440 = vadd.f32 %v140, %v240
  %v441 = vadd.f32 %v141, %v241
  %v442 = vadd.f32 %v142, %v242
  %v443 = vadd.f32 %v143, %v243
  %v444 = vadd.f32 %v144, %v244
  %v445 = vadd.f32 %v145, %v245
  %v446 = vadd.f32 %v146, %v246
  %v447 = vadd.f32 %v147, %v247
  %v448 = vadd.f32 %v148, %v248
  %v449 = vadd.f32 %v149, %v249
  %v450 = vadd.f32 %v150, %v250
  %v451 = vadd.f32 %v151, %v251
  %v452 = vadd.f32 %v152, %v252
  %v453 = vadd.f32 %v153, %v253
  %v454 = vadd.f32 %v154, %v254
  %v455 = vadd.f32 %v155, %v255
  %v456 = vadd.f32 %v156, %v256
  %v457 = vadd.f32 %v157, %v257
  %v458 = vadd.f32 %v158, %v258
  %v459 = vadd.f32 %v159, %v259
  %v460 = vadd.f32 %v160, %v260
  %v461 = vadd.f32 %v161, %v261
  %v462 = vadd.f32 %v162, %v262
  %v463 = vadd.f32 %v163, %v263
  %v464 = vadd.f32 %v164, %v264
  %v465 = vadd.f32 %v165, %v265
  %v466 = vadd.f32 %v166, %v266
  %v467 = vadd.f32 %v167, %v267
  %v468 = vadd.f32 %v168, %v268
  %v469 = vadd.f32 %v169, %v269
  %v470 = vadd.f32 %v170, %v270
  %v471 = vadd.f32 %v171, %v271
  %v472 = vadd.f32 %v172, %v272
  %v473 = vadd.f32 %v173, %v273
  %v474 = vadd.f32 %v174, %v274
  %v475 = vadd.f32 %v175, %v275
  %v476 = vadd.f32 %v176, %v276
  %v477 = vadd.f32 %v177, %v277
  %v478 = vadd.f32 %v178, %v278
  %v479 = vadd.f32 %v179, %v279
  %v480 = vadd.f32 %v180, %v280
  %v481 = vadd.f32 %v181, %v281
  %v482 = vadd.f32 %v182, %v282
  %v483 = vadd.f32 %v183, %v283
  %v484 = vadd.f32 %v184, %v284
  %v485 = vadd.f32 %v185, %v285
  %v486 = vadd.f32 %v186, %v286
  %v487 = vadd.f32 %v187, %v287
  %v488 = vadd.f32 %v188, %v288
  %v489 = vadd.f32 %v189, %v289
  %v490 = vadd.f32 %v190, %v290
  %v491 = vadd.f32 %v191, %v291
  %v492 = vadd.f32 %v192, %v292
  %v493 = vadd.f32 %v193, %v293
  %v494 = vadd.f32 %v194, %v294
  %v495 = vadd.f32 %v195, %v295
  %v496 = vadd.f32 %v196, %v296
  %v497 = vadd.f32 %v197, %v297
  %v498 = vadd.f32 %v198, %v298
  %v499 = vadd.f32 %v199, %v299
  %v500 = vadd.f32 %v200, %v300
  %v501 = vadd.f32 %v201, %v301
  %v502 = vadd.f32 %v202, %v302
  %v503 = vadd.f32 %v203, %v303
  %v504 = vadd.f32 %v204, %v304
  %v505 = vadd.f32 %v205, %v305
  %v506 = vadd.f32 %v206, %v306
  %v507 = vadd.f32 %v207, %v307
  %v508 = vadd.f32 %v208, %v308
  %v509 = vadd.f32 %v209, %v309
  %v510 = vadd.f32 %v210, %v310
  %511 = vst [vmem:[%s2] sm:$0xff] %v311
  %512 = vst [vmem:[%s2 + $0x8] sm:$0xff] %v312
  %513 = vst [vmem:[%s2 + $0x10] sm:$0xff] %v313
  %514 = vst [vmem:[%s2 + $0x18] sm:$0xff] %v314
  %515 = vst [vmem:[%s2 + $0x20] sm:$0xff] %v315
  %516 = vst [vmem:[%s2 + $0x28] sm:$0xff] %v316
  %517 = vst [vmem:[%s2 + $0x30] sm:$0xff] %v317
  %518 = vst [vmem:[%s2 + $0x38] sm:$0xff] %v318
  %519 = vst [vmem:[%s2 + $0x40] sm:$0xff] %v319
  %520 = vst [vmem:[%s2 + $0x48] sm:$0xff] %v320
  %521 = vst [vmem:[%s2 + $0x50] sm:$0xff] %v321
  %522 = vst [vmem:[%s2 + $0x58] sm:$0xff] %v322
  %523 = vst [vmem:[%s2 + $0x60] sm:$0xff] %v323
  %524 = vst [vmem:[%s2 + $0x68] sm:$0xff] %v324
  %525 = vst [vmem:[%s2 + $0x70] sm:$0xff] %v325
  %526 = vst [vmem:[%s2 + $0x78] sm:$0xff] %v326
  %527 = vst [vmem:[%s2 + $0x80] sm:$0xff] %v327
  %528 = vst [vmem:[%s2 + $0x88] sm:$0xff] %v328
  %529 = vst [vmem:[%s2 + $0x90] sm:$0xff] %v329
  %530 = vst [vmem:[%s2 + $0x98] sm:$0xff] %v330
  %531 = vst [vmem:[%s2 + $0xa0] sm:$0xff] %v331
  %532 = vst [vmem:[%s2 + $0xa8] sm:$0xff] %v332
  %533 = vst [vmem:[%s2 + $0xb0] sm:$0xff] %v333
  %534 = vst [vmem:[%s2 + $0xb8] sm:$0xff] %v334
  %535 = vst [vmem:[%s2 + $0xc0] sm:$0xff] %v335
  %536 = vst [vmem:[%s2 + $0xc8] sm:$0xff] %v336
  %537 = vst [vmem:[%s2 + $0xd0] sm:$0xff] %v337
  %538 = vst [vmem:[%s2 + $0xd8] sm:$0xff] %v338
  %539 = vst [vmem:[%s2 + $0xe0] sm:$0xff] %v339
  %540 = vst [vmem:[%s2 + $0xe8] sm:$0xff] %v340
  %541 = vst [vmem:[%s2 + $0xf0] sm:$0xff] %v341
  %542 = vst [vmem:[%s2 + $0xf8] sm:$0xff] %v342
  %543 = vst [vmem:[%s2 + $0x100] sm:$0xff] %v343
  %544 = vst [vmem:[%s2 + $0x108] sm:$0xff] %v344
  %545 = vst [vmem:[%s2 + $0x110] sm:$0xff] %v345
  %546 = vst [vmem:[%s2 + $0x118] sm:$0xff] %v346
  %547 = vst [vmem:[%s2 + $0x120] sm:$0xff] %v347
  %548 = vst [vmem:[%s2 + $0x128] sm:$0xff] %v348
  %549 = vst [vmem:[%s2 + $0x130] sm:$0xff] %v349
  %550 = vst [vmem:[%s2 + $0x138] sm:$0xff] %v350
  %551 = vst [vmem:[%s2 + $0x140] sm:$0xff] %v351
  %552 = vst [vmem:[%s2 + $0x148] sm:$0xff] %v352
  %553 = vst [vmem:[%s2 + $0x150] sm:$0xff] %v353
  %554 = vst [vmem:[%s2 + $0x158] sm:$0xff] %v354
  %555 = vst [vmem:[%s2 + $0x160] sm:$0xff] %v355
  %556 = vst [vmem:[%s2 + $0x168] sm:$0xff] %v356
  %557 = vst [vmem:[%s2 + $0x170] sm:$0xff] %v357
  %558 = vst [vmem:[%s2 + $0x178] sm:$0xff] %v358
  %559 = vst [vmem:[%s2 + $0x180] sm:$0xff] %v359
  %560 = vst [vmem:[%s2 + $0x188] sm:$0xff] %v360
  %561 = vst [vmem:[%s2 + $0x190] sm:$0xff] %v361
  %562 = vst [vmem:[%s2 + $0x198] sm:$0xff] %v362
  %563 = vst [vmem:[%s2 + $0x1a0] sm:$0xff] %v363
  %564 = vst [vmem:[%s2 + $0x1a8] sm:$0xff] %v364
  %565 = vst [vmem:[%s2 + $0x1b0] sm:$0xff] %v365
  %566 = vst [vmem:[%s2 + $0x1b8] sm:$0xff] %v366
  %567 = vst [vmem:[%s2 + $0x1c0] sm:$0xff] %v367
  %568 = vst [vmem:[%s2 + $0x1c8] sm:$0xff] %v368
  %569 = vst [vmem:[%s2 + $0x1d0] sm:$0xff] %v369
  %570 = vst [vmem:[%s2 + $0x1d8] sm:$0xff] %v370
  %571 = vst [vmem:[%s2 + $0x1e0] sm:$0xff] %v371
  %572 = vst [vmem:[%s2 + $0x1e8] sm:$0xff] %v372
  %573 = vst [vmem:[%s2 + $0x1f0] sm:$0xff] %v373
  %574 = vst [vmem:[%s2 + $0x1f8] sm:$0xff] %v374
  %575 = vst [vmem:[%s2 + $0x200] sm:$0xff] %v375
  %576 = vst [vmem:[%s2 + $0x208] sm:$0xff] %v376
  %577 = vst [vmem:[%s2 + $0x210] sm:$0xff] %v377
  %578 = vst [vmem:[%s2 + $0x218] sm:$0xff] %v378
  %579 = vst [vmem:[%s2 + $0x220] sm:$0xff] %v379
  %580 = vst [vmem:[%s2 + $0x228] sm:$0xff] %v380
  %581 = vst [vmem:[%s2 + $0x230] sm:$0xff] %v381
  %582 = vst [vmem:[%s2 + $0x238] sm:$0xff] %v382
  %583 = vst [vmem:[%s2 + $0x240] sm:$0xff] %v383
  %584 = vst [vmem:[%s2 + $0x248] sm:$0xff] %v384
  %585 = vst [vmem:[%s2 + $0x250] sm:$0xff] %v385
  %586 = vst [vmem:[%s2 + $0x258] sm:$0xff] %v386
  %587 = vst [vmem:[%s2 + $0x260] sm:$0xff] %v387
  %588 = vst [vmem:[%s2 + $0x268] sm:$0xff] %v388
  %589 = vst [vmem:[%s2 + $0x270] sm:$0xff] %v389
  %590 = vst [vmem:[%s2 + $0x278] sm:$0xff] %v390
  %591 = vst [vmem:[%s2 + $0x280] sm:$0xff] %v391
  %592 = vst [vmem:[%s2 + $0x288] sm:$0xff] %v392
  %593 = vst [vmem:[%s2 + $0x290] sm:$0xff] %v393
  %594 = vst [vmem:[%s2 + $0x298] sm:$0xff] %v394
  %595 = vst [vmem:[%s2 + $0x2a0] sm:$0xff] %v395
  %596 = vst [vmem:[%s2 + $0x2a8] sm:$0xff] %v396
  %597 = vst [vmem:[%s2 + $0x2b0] sm:$0xff] %v397
  %598 = vst [vmem:[%s2 + $0x2b8] sm:$0xff] %v398
  %599 = vst [vmem:[%s2 + $0x2c0] sm:$0xff] %v399
  %600 = vst [vmem:[%s2 + $0x2c8] sm:$0xff] %v400
  %601 = vst [vmem:[%s2 + $0x2d0] sm:$0xff] %v401
  %602 = vst [vmem:[%s2 + $0x2d8] sm:$0xff] %v402
  %603 = vst [vmem:[%s2 + $0x2e0] sm:$0xff] %v403
  %604 = vst [vmem:[%s2 + $0x2e8] sm:$0xff] %v404
  %605 = vst [vmem:[%s2 + $0x2f0] sm:$0xff] %v405
  %606 = vst [vmem:[%s2 + $0x2f8] sm:$0xff] %v406
  %607 = vst [vmem:[%s2 + $0x300] sm:$0xf] %v407
  %608 = vst [vmem:[%s2 + $0x308] sm:$0xf] %v408
  %609 = vst [vmem:[%s2 + $0x310] sm:$0xf] %v409
  %610 = vst [vmem:[%s2 + $0x318] sm:$0xf] %v410
  %611 = vst [vmem:[%s2 + $0x320] sm:$0xff] %v411
  %612 = vst [vmem:[%s2 + $0x328] sm:$0xff] %v412
  %613 = vst [vmem:[%s2 + $0x330] sm:$0xff] %v413
  %614 = vst [vmem:[%s2 + $0x338] sm:$0xff] %v414
  %615 = vst [vmem:[%s2 + $0x340] sm:$0xff] %v415
  %616 = vst [vmem:[%s2 + $0x348] sm:$0xff] %v416
  %617 = vst [vmem:[%s2 + $0x350] sm:$0xff] %v417
  %618 = vst [vmem:[%s2 + $0x358] sm:$0xff] %v418
  %619 = vst [vmem:[%s2 + $0x360] sm:$0xff] %v419
  %620 = vst [vmem:[%s2 + $0x368] sm:$0xff] %v420
  %621 = vst [vmem:[%s2 + $0x370] sm:$0xff] %v421
  %622 = vst [vmem:[%s2 + $0x378] sm:$0xff] %v422
  %623 = vst [vmem:[%s2 + $0x380] sm:$0xff] %v423
  %624 = vst [vmem:[%s2 + $0x388] sm:$0xff] %v424
  %625 = vst [vmem:[%s2 + $0x390] sm:$0xff] %v425
  %626 = vst [vmem:[%s2 + $0x398] sm:$0xff] %v426
  %627 = vst [vmem:[%s2 + $0x3a0] sm:$0xff] %v427
  %628 = vst [vmem:[%s2 + $0x3a8] sm:$0xff] %v428
  %629 = vst [vmem:[%s2 + $0x3b0] sm:$0xff] %v429
  %630 = vst [vmem:[%s2 + $0x3b8] sm:$0xff] %v430
  %631 = vst [vmem:[%s2 + $0x3c0] sm:$0xff] %v431
  %632 = vst [vmem:[%s2 + $0x3c8] sm:$0xff] %v432
  %633 = vst [vmem:[%s2 + $0x3d0] sm:$0xff] %v433
  %634 = vst [vmem:[%s2 + $0x3d8] sm:$0xff] %v434
  %635 = vst [vmem:[%s2 + $0x3e0] sm:$0xff] %v435
  %636 = vst [vmem:[%s2 + $0x3e8] sm:$0xff] %v436
  %637 = vst [vmem:[%s2 + $0x3f0] sm:$0xff] %v437
  %638 = vst [vmem:[%s2 + $0x3f8] sm:$0xff] %v438
  %639 = vst [vmem:[%s2 + $0x400] sm:$0xff] %v439
  %640 = vst [vmem:[%s2 + $0x408] sm:$0xff] %v440
  %641 = vst [vmem:[%s2 + $0x410] sm:$0xff] %v441
  %642 = vst [vmem:[%s2 + $0x418] sm:$0xff] %v442
  %643 = vst [vmem:[%s2 + $0x420] sm:$0xff] %v443
  %644 = vst [vmem:[%s2 + $0x428] sm:$0xff] %v444
  %645 = vst [vmem:[%s2 + $0x430] sm:$0xff] %v445
  %646 = vst [vmem:[%s2 + $0x438] sm:$0xff] %v446
  %647 = vst [vmem:[%s2 + $0x440] sm:$0xff] %v447
  %648 = vst [vmem:[%s2 + $0x448] sm:$0xff] %v448
  %649 = vst [vmem:[%s2 + $0x450] sm:$0xff] %v449
  %650 = vst [vmem:[%s2 + $0x458] sm:$0xff] %v450
  %651 = vst [vmem:[%s2 + $0x460] sm:$0xff] %v451
  %652 = vst [vmem:[%s2 + $0x468] sm:$0xff] %v452
  %653 = vst [vmem:[%s2 + $0x470] sm:$0xff] %v453
  %654 = vst [vmem:[%s2 + $0x478] sm:$0xff] %v454
  %655 = vst [vmem:[%s2 + $0x480] sm:$0xff] %v455
  %656 = vst [vmem:[%s2 + $0x488] sm:$0xff] %v456
  %657 = vst [vmem:[%s2 + $0x490] sm:$0xff] %v457
  %658 = vst [vmem:[%s2 + $0x498] sm:$0xff] %v458
  %659 = vst [vmem:[%s2 + $0x4a0] sm:$0xff] %v459
  %660 = vst [vmem:[%s2 + $0x4a8] sm:$0xff] %v460
  %661 = vst [vmem:[%s2 + $0x4b0] sm:$0xff] %v461
  %662 = vst [vmem:[%s2 + $0x4b8] sm:$0xff] %v462
  %663 = vst [vmem:[%s2 + $0x4c0] sm:$0xff] %v463
  %664 = vst [vmem:[%s2 + $0x4c8] sm:$0xff] %v464
  %665 = vst [vmem:[%s2 + $0x4d0] sm:$0xff] %v465
  %666 = vst [vmem:[%s2 + $0x4d8] sm:$0xff] %v466
  %667 = vst [vmem:[%s2 + $0x4e0] sm:$0xff] %v467
  %668 = vst [vmem:[%s2 + $0x4e8] sm:$0xff] %v468
  %669 = vst [vmem:[%s2 + $0x4f0] sm:$0xff] %v469
  %670 = vst [vmem:[%s2 + $0x4f8] sm:$0xff] %v470
  %671 = vst [vmem:[%s2 + $0x500] sm:$0xff] %v471
  %672 = vst [vmem:[%s2 + $0x508] sm:$0xff] %v472
  %673 = vst [vmem:[%s2 + $0x510] sm:$0xff] %v473
  %674 = vst [vmem:[%s2 + $0x518] sm:$0xff] %v474
  %675 = vst [vmem:[%s2 + $0x520] sm:$0xff] %v475
  %676 = vst [vmem:[%s2 + $0x528] sm:$0xff] %v476
  %677 = vst [vmem:[%s2 + $0x530] sm:$0xff] %v477
  %678 = vst [vmem:[%s2 + $0x538] sm:$0xff] %v478
  %679 = vst [vmem:[%s2 + $0x540] sm:$0xff] %v479
  %680 = vst [vmem:[%s2 + $0x548] sm:$0xff] %v480
  %681 = vst [vmem:[%s2 + $0x550] sm:$0xff] %v481
  %682 = vst [vmem:[%s2 + $0x558] sm:$0xff] %v482
  %683 = vst [vmem:[%s2 + $0x560] sm:$0xff] %v483
  %684 = vst [vmem:[%s2 + $0x568] sm:$0xff] %v484
  %685 = vst [vmem:[%s2 + $0x570] sm:$0xff] %v485
  %686 = vst [vmem:[%s2 + $0x578] sm:$0xff] %v486
  %687 = vst [vmem:[%s2 + $0x580] sm:$0xff] %v487
  %688 = vst [vmem:[%s2 + $0x588] sm:$0xff] %v488
  %689 = vst [vmem:[%s2 + $0x590] sm:$0xff] %v489
  %690 = vst [vmem:[%s2 + $0x598] sm:$0xff] %v490
  %691 = vst [vmem:[%s2 + $0x5a0] sm:$0xff] %v491
  %692 = vst [vmem:[%s2 + $0x5a8] sm:$0xff] %v492
  %693 = vst [vmem:[%s2 + $0x5b0] sm:$0xff] %v493
  %694 = vst [vmem:[%s2 + $0x5b8] sm:$0xff] %v494
  %695 = vst [vmem:[%s2 + $0x5c0] sm:$0xff] %v495
  %696 = vst [vmem:[%s2 + $0x5c8] sm:$0xff] %v496
  %697 = vst [vmem:[%s2 + $0x5d0] sm:$0xff] %v497
  %698 = vst [vmem:[%s2 + $0x5d8] sm:$0xff] %v498
  %699 = vst [vmem:[%s2 + $0x5e0] sm:$0xff] %v499
  %700 = vst [vmem:[%s2 + $0x5e8] sm:$0xff] %v500
  %701 = vst [vmem:[%s2 + $0x5f0] sm:$0xff] %v501
  %702 = vst [vmem:[%s2 + $0x5f8] sm:$0xff] %v502
  %703 = vst [vmem:[%s2 + $0x600] sm:$0xff] %v503
  %704 = vst [vmem:[%s2 + $0x608] sm:$0xff] %v504
  %705 = vst [vmem:[%s2 + $0x610] sm:$0xff] %v505
  %706 = vst [vmem:[%s2 + $0x618] sm:$0xff] %v506
  %707 = vst [vmem:[%s2 + $0x620] sm:$0xf] %v507
  %708 = vst [vmem:[%s2 + $0x628] sm:$0xf] %v508
  %709 = vst [vmem:[%s2 + $0x630] sm:$0xf] %v509
  %710 = vst [vmem:[%s2 + $0x638] sm:$0xf] %v510
  // Predicated region
  $region10: #{tpu_custom_call.1} parent=0 // pred_check
    _
  $region11: #{tpu_custom_call.1} parent=0 // pred_check_branch
    %712 = sbr.rel (0) target = $region13
  $region12: #{tpu_custom_call.1} parent=0 // pred_region
    _
  $region13: #{tpu_custom_call.1} parent=0 // pred_fallthru
    _
  // Predicated region
  $region14: #{tpu_custom_call.1} parent=0 // pred_check
    _
  $region15: #{tpu_custom_call.1} parent=0 // pred_check_branch
    %714 = sbr.rel (0) target = $region17
  $region16: #{tpu_custom_call.1} parent=0 // pred_region
    _
  $region17: #{tpu_custom_call.1} parent=0 // pred_fallthru
    _

</llo_original>
